<compile_context>
chip_gen: v7x
topology: tpu7x:2x2x1
jax: 0.10.0
libtpu: 0.0.40
codegen_flags: <defaults>
</compile_context>

<pallas_src>
import math

import jax
import jax.numpy as jnp
from jax.experimental import pallas as pl
from jax.experimental.pallas import tpu as pltpu


def _hyper_embedder_kernel(scalars_ref, x_ref, wx_ref, wl_ref, s_ref, o_ref):
    # scalars_ref : SMEM (2,) f32        -> [c_shift, forward_scaler]
    # x_ref       : VMEM (tb, in_dim)    -> input batch tile
    # wx_ref      : VMEM (in_dim, hidden)-> W^T rows for real features (resident)
    # wl_ref      : VMEM (1, hidden)     -> W^T row for the appended c_shift column
    # s_ref       : VMEM (1, hidden)     -> learnable Scaler parameter (resident)
    # o_ref       : VMEM (tb, hidden)    -> output tile
    c_shift = scalars_ref[0]
    fwd_scaler = scalars_ref[1]

    x = x_ref[...].astype(jnp.float32)

    # --- concat c_shift column + L2 normalize (concat done analytically) ---
    sumsq = jnp.sum(x * x, axis=-1, keepdims=True) + c_shift * c_shift
    inv_norm = jax.lax.rsqrt(sumsq)  # norm >= |c_shift| > 0, no eps clamp needed

    # --- HyperDense (bias-free linear): [x, c_shift] * inv_norm @ W^T ---
    y = jnp.dot(x * inv_norm, wx_ref[...], preferred_element_type=jnp.float32)
    y = y + (c_shift * inv_norm) * wl_ref[...]

    # --- Scaler: scaler_param * forward_scaler * y ---
    y = y * (s_ref[...] * fwd_scaler)

    # --- final L2 normalize (torch F.normalize: x / max(||x||, eps)) ---
    norm = jnp.sqrt(jnp.sum(y * y, axis=-1, keepdims=True))
    y = y / jnp.maximum(norm, 1e-12)

    o_ref[...] = y.astype(o_ref.dtype)


def _pick_tile_b(batch, in_dim, hidden, dtype_bytes=4):
    """Pick the largest batch tile that keeps the pipeline under a v7x-safe VMEM budget."""
    vmem_budget = 40 * 1024 * 1024                    # conservative vs v7x 64 MiB physical
    resident = (in_dim * hidden + 2 * hidden) * 4     # weights + scaler row, f32
    per_row = 2 * (in_dim + hidden) * dtype_bytes     # double-buffered x + out blocks
    tb = max(8, (vmem_budget - resident) // max(per_row, 1))
    tb = min(tb, 2048)
    if tb >= batch:
        return batch                                  # full-batch block (legal for any B)
    return max(8, (tb // 8) * 8)                      # second-minor block dim multiple of 8


def hyper_embedder_forward(x, weight, scaler_param, *, scaler_init, scaler_scale,
                           c_shift=3.0):
    """HyperEmbedder forward.

    x            : (B, in_dim) float32
    weight       : (hidden, in_dim + 1) float32  (torch Linear layout, no bias)
    scaler_param : (hidden,) float32             (init: ones * scaler_scale)
    """
    B, in_dim = x.shape
    hidden, in_dim_p1 = weight.shape
    assert in_dim_p1 == in_dim + 1, "weight must have in_dim + 1 input features"

    forward_scaler = scaler_init / scaler_scale

    w_t = jnp.transpose(weight)                       # (in_dim + 1, hidden)
    wx = w_t[:in_dim, :]                              # (in_dim, hidden)
    wl = w_t[in_dim:, :]                              # (1, hidden)  -> c_shift column row
    s2d = scaler_param.reshape(1, hidden)
    scalars = jnp.asarray([c_shift, forward_scaler], jnp.float32)

    tb = _pick_tile_b(B, in_dim, hidden)
    grid = (pl.cdiv(B, tb),)                          # works for any B (last tile padded)

    out = pl.pallas_call(
        _hyper_embedder_kernel,
        out_shape=jax.ShapeDtypeStruct((B, hidden), x.dtype),
        grid_spec=pltpu.PrefetchScalarGridSpec(
            num_scalar_prefetch=0,
            grid=grid,
            in_specs=[
                pl.BlockSpec(memory_space=pltpu.SMEM),              # [c_shift, fwd_scaler]
                pl.BlockSpec((tb, in_dim), lambda i: (i, 0)),       # x tile (streamed)
                pl.BlockSpec((in_dim, hidden), lambda i: (0, 0)),   # Wx, resident
                pl.BlockSpec((1, hidden), lambda i: (0, 0)),        # w_last row, resident
                pl.BlockSpec((1, hidden), lambda i: (0, 0)),        # scaler, resident
            ],
            out_specs=pl.BlockSpec((tb, hidden), lambda i: (i, 0)),
        ),
        compiler_params=pltpu.CompilerParams(
            dimension_semantics=("parallel",),        # shards batch grid across v7x's 2 TCs
            vmem_limit_bytes=48 * 1024 * 1024,
        ),
    )(scalars, x, wx, wl, s2d)
    return out


if __name__ == "__main__":
    # Module config: hidden_dim=128, input features=32, defaults for scaler/c_shift.
    hidden_dim = 128
    in_dim = 32
    batch = 64
    c_shift = 3.0
    scaler_init = math.sqrt(2.0 / hidden_dim)
    scaler_scale = math.sqrt(2.0 / hidden_dim)

    key = jax.random.PRNGKey(0)
    kx, kw = jax.random.split(key)
    x = jax.random.normal(kx, (batch, in_dim), dtype=jnp.float32)
    # HyperDense: LazyLinear(hidden_dim, bias=False) with orthogonal init, gain=1.0.
    weight = jax.nn.initializers.orthogonal(scale=1.0)(kw, (hidden_dim, in_dim + 1),
                                                       jnp.float32)
    # Scaler parameter init: ones(hidden_dim) * scaler_scale.
    scaler_param = jnp.ones((hidden_dim,), jnp.float32) * scaler_scale

    out = hyper_embedder_forward(x, weight, scaler_param,
                                 scaler_init=scaler_init,
                                 scaler_scale=scaler_scale,
                                 c_shift=c_shift)
    out = jax.block_until_ready(out)

    # Pure-JAX reference mirroring the PyTorch forward.
    new_axis = jnp.full((batch, 1), c_shift, jnp.float32)
    xa = jnp.concatenate([x, new_axis], axis=-1)
    xa = xa / jnp.maximum(jnp.linalg.norm(xa, axis=-1, keepdims=True), 1e-12)
    y = xa @ weight.T
    y = scaler_param * (scaler_init / scaler_scale) * y
    ref = y / jnp.maximum(jnp.linalg.norm(y, axis=-1, keepdims=True), 1e-12)

    assert out.shape == (batch, hidden_dim)
    max_err = float(jnp.max(jnp.abs(out - ref)))
    assert jnp.allclose(out, ref, atol=1e-4, rtol=1e-4), max_err

    print("KERNEL_OK")
</pallas_src>

<mosaic_0001>
module attributes {stable_mosaic.version = 11 : i64} {
  func.func @_hyper_embedder_kernel(%arg0: i32, %arg1: memref<2xf32, #tpu.memory_space<smem>>, %arg2: memref<64x32xf32, #tpu.memory_space<vmem>>, %arg3: memref<32x128xf32, #tpu.memory_space<vmem>>, %arg4: memref<1x128xf32, #tpu.memory_space<vmem>>, %arg5: memref<1x128xf32, #tpu.memory_space<vmem>>, %arg6: memref<64x128xf32, #tpu.memory_space<vmem>>) attributes {dimension_semantics = [#tpu.dimension_semantics<parallel>], iteration_bounds = array<i64: 1>, scalar_prefetch = 0 : i64, scratch_operands = 0 : i64, tpu.core_type = #tpu.core_type<tc>, window_params = [{transform_indices = @transform_0, window_bounds = array<i64: 2>}, {transform_indices = @transform_1, window_bounds = array<i64: 64, 32>}, {pipeline_mode = #tpu.pipeline_mode<synchronous>, transform_indices = @transform_2, window_bounds = array<i64: 32, 128>}, {pipeline_mode = #tpu.pipeline_mode<synchronous>, transform_indices = @transform_3, window_bounds = array<i64: 1, 128>}, {pipeline_mode = #tpu.pipeline_mode<synchronous>, transform_indices = @transform_4, window_bounds = array<i64: 1, 128>}, {transform_indices = @transform_5, window_bounds = array<i64: 64, 128>}]} {
    %c0 = arith.constant 0 : index
    %0 = memref.load %arg1[%c0] : memref<2xf32, #tpu.memory_space<smem>>
    %c1 = arith.constant 1 : index
    %1 = memref.load %arg1[%c1] : memref<2xf32, #tpu.memory_space<smem>>
    %c0_0 = arith.constant 0 : index
    %c0_1 = arith.constant 0 : index
    %2 = vector.load %arg2[%c0_0, %c0_1] : memref<64x32xf32, #tpu.memory_space<vmem>>, vector<64x32xf32>
    %3 = arith.mulf %2, %2 : vector<64x32xf32>
    %cst = arith.constant dense<0.000000e+00> : vector<64xf32>
    %4 = vector.multi_reduction <add>, %3, %cst [1] : vector<64x32xf32> to vector<64xf32>
    %5 = vector.shape_cast %4 : vector<64xf32> to vector<64x1xf32>
    %6 = arith.mulf %0, %0 : f32
    %7 = vector.broadcast %6 : f32 to vector<64x1xf32>
    %8 = arith.addf %5, %7 : vector<64x1xf32>
    %9 = math.rsqrt %8 : vector<64x1xf32>
    %10 = vector.broadcast %9 : vector<64x1xf32> to vector<64x32xf32>
    %11 = arith.mulf %2, %10 : vector<64x32xf32>
    %c0_2 = arith.constant 0 : index
    %c0_3 = arith.constant 0 : index
    %12 = vector.load %arg3[%c0_2, %c0_3] : memref<32x128xf32, #tpu.memory_space<vmem>>, vector<32x128xf32>
    %cst_4 = arith.constant dense<0.000000e+00> : vector<64x128xf32>
    %13 = tpu.matmul %11, %12, %cst_4 {dimension_numbers = #tpu.dot_dimension_numbers<[1], [0], [0], [1], [0, 0, 1, 1], [], []>} : vector<64x32xf32>, vector<32x128xf32>, vector<64x128xf32> -> vector<64x128xf32>
    %14 = vector.broadcast %0 : f32 to vector<64x1xf32>
    %15 = arith.mulf %14, %9 : vector<64x1xf32>
    %c0_5 = arith.constant 0 : index
    %c0_6 = arith.constant 0 : index
    %16 = vector.load %arg4[%c0_5, %c0_6] : memref<1x128xf32, #tpu.memory_space<vmem>>, vector<1x128xf32>
    %17 = vector.broadcast %15 : vector<64x1xf32> to vector<64x128xf32>
    %18 = vector.broadcast %16 : vector<1x128xf32> to vector<64x128xf32>
    %19 = arith.mulf %17, %18 : vector<64x128xf32>
    %20 = arith.addf %13, %19 : vector<64x128xf32>
    %c0_7 = arith.constant 0 : index
    %c0_8 = arith.constant 0 : index
    %21 = vector.load %arg5[%c0_7, %c0_8] : memref<1x128xf32, #tpu.memory_space<vmem>>, vector<1x128xf32>
    %22 = vector.broadcast %1 : f32 to vector<1x128xf32>
    %23 = arith.mulf %21, %22 : vector<1x128xf32>
    %24 = vector.broadcast %23 : vector<1x128xf32> to vector<64x128xf32>
    %25 = arith.mulf %20, %24 : vector<64x128xf32>
    %26 = arith.mulf %25, %25 : vector<64x128xf32>
    %cst_9 = arith.constant dense<0.000000e+00> : vector<64xf32>
    %27 = vector.multi_reduction <add>, %26, %cst_9 [1] : vector<64x128xf32> to vector<64xf32>
    %28 = vector.shape_cast %27 : vector<64xf32> to vector<64x1xf32>
    %29 = math.sqrt %28 : vector<64x1xf32>
    %cst_10 = arith.constant 9.99999996E-13 : f32
    %30 = vector.broadcast %cst_10 : f32 to vector<64x1xf32>
    %31 = arith.maximumf %29, %30 : vector<64x1xf32>
    %32 = vector.broadcast %31 : vector<64x1xf32> to vector<64x128xf32>
    %33 = arith.divf %25, %32 : vector<64x128xf32>
    %c0_11 = arith.constant 0 : index
    %c0_12 = arith.constant 0 : index
    %34 = vector.load %arg6[%c0_11, %c0_12] : memref<64x128xf32, #tpu.memory_space<vmem>>, vector<64x128xf32>
    tpu.vector_store %arg6[%c0_11, %c0_12], %33 {strides = array<i32>} : memref<64x128xf32, #tpu.memory_space<vmem>>, vector<64x128xf32>,
    return
  }
  func.func @transform_0(%arg0: i32) -> i32 {
    %c0_i32 = arith.constant 0 : i32
    %c0_i32_0 = arith.constant 0 : i32
    return %c0_i32 : i32
  }
  func.func @transform_1(%arg0: i32) -> (i32, i32) {
    %c0_i32 = arith.constant 0 : i32
    %c0_i32_0 = arith.constant 0 : i32
    return %arg0, %c0_i32 : i32, i32
  }
  func.func @transform_2(%arg0: i32) -> (i32, i32) {
    %c0_i32 = arith.constant 0 : i32
    %c0_i32_0 = arith.constant 0 : i32
    %c0_i32_1 = arith.constant 0 : i32
    return %c0_i32, %c0_i32_0 : i32, i32
  }
  func.func @transform_3(%arg0: i32) -> (i32, i32) {
    %c0_i32 = arith.constant 0 : i32
    %c0_i32_0 = arith.constant 0 : i32
    %c0_i32_1 = arith.constant 0 : i32
    return %c0_i32, %c0_i32_0 : i32, i32
  }
  func.func @transform_4(%arg0: i32) -> (i32, i32) {
    %c0_i32 = arith.constant 0 : i32
    %c0_i32_0 = arith.constant 0 : i32
    %c0_i32_1 = arith.constant 0 : i32
    return %c0_i32, %c0_i32_0 : i32, i32
  }
  func.func @transform_5(%arg0: i32) -> (i32, i32) {
    %c0_i32 = arith.constant 0 : i32
    %c0_i32_0 = arith.constant 0 : i32
    return %arg0, %c0_i32 : i32, i32
  }
}

</mosaic_0001>

<llo_original>
// kernel: tpu_custom_call.1
$region0: #{tpu_custom_call.1}
  #allocation0 [shape = 'u32[]', space=smem, size = 0x4, offset = 0x4, fixed_abs, tag = 'smem constant byte address 0x4 - core index']
  #allocation1 [shape = 'u32[144,128]{1,0:T(1,128)}', space=vmem, size = 0x12000, scoped, tag = 'internal scratch']
  %s0 = inlined_call_operand.vmem [shape: f32[2], index: 0, kind: input, shape index: {}]
  %s1 = inlined_call_operand.vmem [shape: f32[64,32], index: 1, kind: input, shape index: {}]
  %s2 = inlined_call_operand.vmem [shape: f32[32,128], index: 2, kind: input, shape index: {}]
  %s3 = inlined_call_operand.vmem [shape: f32[1,128], index: 3, kind: input, shape index: {}]
  %s4 = inlined_call_operand.vmem [shape: f32[1,128], index: 4, kind: input, shape index: {}]
  %s5 = inlined_call_operand.hbm [shape: f32[64,128], index: 5, kind: output, shape index: {}]
  %s6 = sld [smem:[#allocation0]]
  $region34: #{tpu_custom_call.1} parent=0
    _
  %s8 = ssub.s32 1, %s6
  %s9 = scalar_select 0, %s8, %s6
  $region1: #{tpu_custom_call.1} parent=0
    #allocation2 [shape = 'u8[512]{0}', space=smem, size = 0x200, scoped, tag = 'input window, operand 0, single buffered']
    #allocation3 [shape = 's32[1]{0}', space=sflag, size = 0x4, scoped, tag = 'scoped memory for tpu_custom_call.1']
    #allocation4 [shape = 's32[1]{0}', space=sflag, size = 0x4, scoped, tag = 'scoped memory for tpu_custom_call.1']
    #allocation5 [shape = 'u8[32768]{0}', space=vmem, size = 0x8000, scoped, tag = 'output window, operand 0, single buffered']
    %10 = vsyncpa [#allocation4], 0
    %11 = vsyncpa [#allocation3], 0
    // Predicated region
    $region2: #{tpu_custom_call.1} parent=1 // pred_check
      _
    $region3: #{tpu_custom_call.1} parent=1 // pred_check_branch
      %13 = sbr.rel (0) target = $region5
    $region4: #{tpu_custom_call.1} parent=1 // pred_region
      %s15 = ssub.s32 16, 16
      %16 = vsyncadd [#allocation4], %s15
      %s18 = sshll.u32 %s0, 4
      %s19 = int_to_ptr.vmem [resolvable:$true] %s18
      %21 = dma.vmem_to_smem %s19, 16, [#allocation2], [#allocation4]
    $region5: #{tpu_custom_call.1} parent=1 // pred_fallthru
      _
    // Predicated region
    $region6: #{tpu_custom_call.1} parent=1 // pred_check
      _
    $region7: #{tpu_custom_call.1} parent=1 // pred_check_branch
      %23 = sbr.rel (0) target = $region9
    $region8: #{tpu_custom_call.1} parent=1 // pred_region
      _
    $region9: #{tpu_custom_call.1} parent=1 // pred_fallthru
      _
    // Predicated region
    $region10: #{tpu_custom_call.1} parent=1 // pred_check
      _
    $region11: #{tpu_custom_call.1} parent=1 // pred_check_branch
      %25 = sbr.rel (0) target = $region13
    $region12: #{tpu_custom_call.1} parent=1 // pred_region
      _
    $region13: #{tpu_custom_call.1} parent=1 // pred_fallthru
      _
    // Predicated region
    $region14: #{tpu_custom_call.1} parent=1 // pred_check
      _
    $region15: #{tpu_custom_call.1} parent=1 // pred_check_branch
      %27 = sbr.rel (0) target = $region17
    $region16: #{tpu_custom_call.1} parent=1 // pred_region
      _
    $region17: #{tpu_custom_call.1} parent=1 // pred_fallthru
      _
    // Predicated region
    $region18: #{tpu_custom_call.1} parent=1 // pred_check
      _
    $region19: #{tpu_custom_call.1} parent=1 // pred_check_branch
      %29 = sbr.rel (0) target = $region21
    $region20: #{tpu_custom_call.1} parent=1 // pred_region
      _
    $region21: #{tpu_custom_call.1} parent=1 // pred_fallthru
      _
    // Predicated region
    $region22: #{tpu_custom_call.1} parent=1 // pred_check
      _
    $region23: #{tpu_custom_call.1} parent=1 // pred_check_branch
      %31 = sbr.rel (0) target = $region25
    $region24: #{tpu_custom_call.1} parent=1 // pred_region
      %32 = dma.done [#allocation4], 16
    $region25: #{tpu_custom_call.1} parent=1 // pred_fallthru
      _
    %33 = sfence
    %s34 = sld [smem:[#allocation2]]
    %s35 = sld [smem:[#allocation2 + $0x1]]
    %v36 = vld [vmem:[%s1] sm:$0xff]
    %v37 = vld [vmem:[%s1 + $0x8] sm:$0xff]
    %v38 = vld [vmem:[%s1 + $0x10] sm:$0xff]
    %v39 = vld [vmem:[%s1 + $0x18] sm:$0xff]
    %v40 = vld [vmem:[%s1 + $0x20] sm:$0xff]
    %v41 = vld [vmem:[%s1 + $0x28] sm:$0xff]
    %v42 = vld [vmem:[%s1 + $0x30] sm:$0xff]
    %v43 = vld [vmem:[%s1 + $0x38] sm:$0xff]
    %v44 = vmul.f32 %v36, %v36
    %v45 = vmul.f32 %v37, %v37
    %v46 = vmul.f32 %v38, %v38
    %v47 = vmul.f32 %v39, %v39
    %v48 = vmul.f32 %v40, %v40
    %v49 = vmul.f32 %v41, %v41
    %v50 = vmul.f32 %v42, %v42
    %v51 = vmul.f32 %v43, %v43
    %vm52 = vcmask 261120
    %v53 = vsel %vm52, %v44, 0.0
    %54 = vadd.xlane.f32.xlu0 %v53
    %v55 = vpop.xlane.xlu0 %54
    %v56 = vsel %vm52, %v45, 0.0
    %57 = vadd.xlane.f32.xlu0 %v56
    %v58 = vpop.xlane.xlu0 %57
    %v59 = vsel %vm52, %v46, 0.0
    %60 = vadd.xlane.f32.xlu0 %v59
    %v61 = vpop.xlane.xlu0 %60
    %v62 = vsel %vm52, %v47, 0.0
    %63 = vadd.xlane.f32.xlu0 %v62
    %v64 = vpop.xlane.xlu0 %63
    %v65 = vsel %vm52, %v48, 0.0
    %66 = vadd.xlane.f32.xlu0 %v65
    %v67 = vpop.xlane.xlu0 %66
    %v68 = vsel %vm52, %v49, 0.0
    %69 = vadd.xlane.f32.xlu0 %v68
    %v70 = vpop.xlane.xlu0 %69
    %v71 = vsel %vm52, %v50, 0.0
    %72 = vadd.xlane.f32.xlu0 %v71
    %v73 = vpop.xlane.xlu0 %72
    %v74 = vsel %vm52, %v51, 0.0
    %75 = vadd.xlane.f32.xlu0 %v74
    %v76 = vpop.xlane.xlu0 %75
    %s77 = smul.f32 %s34, %s34
    %v78 = vstv %s77
    %v79 = vadd.f32 %v55, %v78
    %v80 = vadd.f32 %v58, %v78
    %v81 = vadd.f32 %v61, %v78
    %v82 = vadd.f32 %v64, %v78
    %v83 = vadd.f32 %v67, %v78
    %v84 = vadd.f32 %v70, %v78
    %v85 = vadd.f32 %v73, %v78
    %v86 = vadd.f32 %v76, %v78
    %v87 = vrsqrt.pop %v79
    %v88 = vrsqrt.pop %v80
    %v89 = vrsqrt.pop %v81
    %v90 = vrsqrt.pop %v82
    %v91 = vrsqrt.pop %v83
    %v92 = vrsqrt.pop %v84
    %v93 = vrsqrt.pop %v85
    %v94 = vrsqrt.pop %v86
    %v95 = vmul.f32 %v36, %v87
    %v96 = vmul.f32 %v37, %v88
    %v97 = vmul.f32 %v38, %v89
    %v98 = vmul.f32 %v39, %v90
    %v99 = vmul.f32 %v40, %v91
    %v100 = vmul.f32 %v41, %v92
    %v101 = vmul.f32 %v42, %v93
    %v102 = vmul.f32 %v43, %v94
    %v103 = vld [vmem:[%s2] sm:$0xff]
    %v104 = vld [vmem:[%s2 + $0x8] sm:$0xff]
    %v105 = vld [vmem:[%s2 + $0x10] sm:$0xff]
    %v106 = vld [vmem:[%s2 + $0x18] sm:$0xff]
    %v107 = vstv %s34
    %v108 = vmul.f32 %v107, %v87
    %v109 = vmul.f32 %v107, %v88
    %v110 = vmul.f32 %v107, %v89
    %v111 = vmul.f32 %v107, %v90
    %v112 = vmul.f32 %v107, %v91
    %v113 = vmul.f32 %v107, %v92
    %v114 = vmul.f32 %v107, %v93
    %v115 = vmul.f32 %v107, %v94
    %v116 = vld [vmem:[%s3] sm:$0x1]
    %v118 = vlaneseq
    %v119 = vshrl.u32 %v118, 7
    %v120 = vsub.s32 0, %v119
    %v121 = vrot.slane %v116, %v120
    %v123 = vmul.f32 %v108, %v121
    %v124 = vmul.f32 %v109, %v121
    %v125 = vmul.f32 %v110, %v121
    %v126 = vmul.f32 %v111, %v121
    %v127 = vmul.f32 %v112, %v121
    %v128 = vmul.f32 %v113, %v121
    %v129 = vmul.f32 %v114, %v121
    %v130 = vmul.f32 %v115, %v121
    %v132 = vsel %vm52, %v95, 0
    %v135 = vsel %vm52, %v96, 0
    %v138 = vsel %vm52, %v97, 0
    %v141 = vsel %vm52, %v98, 0
    %v144 = vsel %vm52, %v99, 0
    %v147 = vsel %vm52, %v100, 0
    %v150 = vsel %vm52, %v101, 0
    %v153 = vsel %vm52, %v102, 0
    %155 = vmatprep.subr.mxu0 0.0
    %156 = vmatpush1.msra.mxu0 %v103
    %157 = vmatprep.subr.mxu0 0.0
    %158 = vmatpush1.msra.mxu0 %v104
    %159 = vmatprep.subr.mxu0 0.0
    %160 = vmatpush1.msra.mxu0 %v105
    %161 = vmatprep.subr.mxu0 0.0
    %162 = vmatpush1.msra.mxu0 %v106
    %163 = vmatprep.subr.mxu0 0.0
    %164 = vmatpush1.msra.mxu0 0.0
    %165 = vmatprep.subr.mxu0 0.0
    %166 = vmatpush1.msra.mxu0 0.0
    %167 = vmatprep.subr.mxu0 0.0
    %168 = vmatpush1.msra.mxu0 0.0
    %169 = vmatprep.subr.mxu0 0.0
    %170 = vmatpush1.msra.mxu0 0.0
    %171 = vmatprep.subr.mxu0 0.0
    %172 = vmatpush1.msra.mxu0 0.0
    %173 = vmatprep.subr.mxu0 0.0
    %174 = vmatpush1.msra.mxu0 0.0
    %175 = vmatprep.subr.mxu0 0.0
    %176 = vmatpush1.msra.mxu0 0.0
    %177 = vmatprep.subr.mxu0 0.0
    %178 = vmatpush1.msra.mxu0 0.0
    %179 = vmatprep.subr.mxu0 0.0
    %180 = vmatpush1.msra.mxu0 0.0
    %181 = vmatprep.subr.mxu0 0.0
    %182 = vmatpush1.msra.mxu0 0.0
    %183 = vmatprep.subr.mxu0 0.0
    %184 = vmatpush1.msra.mxu0 0.0
    %185 = vmatprep.subr.mxu0 0.0
    %186 = vmatpush1.msra.mxu0 0.0
    %187 = vmatprep.subr.mxu0 0.0
    %188 = vmatpush1.msra.mxu0 0.0
    %189 = vmatprep.subr.mxu0 0.0
    %190 = vmatpush1.msra.mxu0 0.0
    %191 = vmatprep.subr.mxu0 0.0
    %192 = vmatpush1.msra.mxu0 0.0
    %193 = vmatprep.subr.mxu0 0.0
    %194 = vmatpush1.msra.mxu0 0.0
    %195 = vmatprep.subr.mxu0 0.0
    %196 = vmatpush1.msra.mxu0 0.0
    %197 = vmatprep.subr.mxu0 0.0
    %198 = vmatpush1.msra.mxu0 0.0
    %199 = vmatprep.subr.mxu0 0.0
    %200 = vmatpush1.msra.mxu0 0.0
    %201 = vmatprep.subr.mxu0 0.0
    %202 = vmatpush1.msra.mxu0 0.0
    %203 = vmatprep.subr.mxu0 0.0
    %204 = vmatpush1.msra.mxu0 0.0
    %205 = vmatprep.subr.mxu0 0.0
    %206 = vmatpush1.msra.mxu0 0.0
    %207 = vmatprep.subr.mxu0 0.0
    %208 = vmatpush1.msra.mxu0 0.0
    %209 = vmatprep.subr.mxu0 0.0
    %210 = vmatpush1.msra.mxu0 0.0
    %211 = vmatprep.subr.mxu0 0.0
    %212 = vmatpush1.msra.mxu0 0.0
    %213 = vmatprep.subr.mxu0 0.0
    %214 = vmatpush1.msra.mxu0 0.0
    %215 = vmatprep.subr.mxu0 0.0
    %216 = vmatpush1.msra.mxu0 0.0
    %217 = vmatprep.subr.mxu0 0.0
    %218 = vmatpush1.msra.mxu0 0.0
    %219 = vmatprep.mubr.f32.mxu0 0.0
    %220 = vmatmul.mubr.f32.gmra.mrb[0].mxu0 %v132
    %v221 = vpop.f32.mrb[0].mxu0
    %v222 = vadd.f32 %v123, %v221
    %v223 = vpop.f32.mrb[0].mxu0
    %224 = vmatprep.mubr.f32.mxu0 0.0
    %225 = vmatmul.mubr.f32.gmra.mrb[0].mxu0 %v135
    %v226 = vpop.f32.mrb[0].mxu0
    %v227 = vadd.f32 %v124, %v226
    %v228 = vpop.f32.mrb[0].mxu0
    %229 = vmatprep.mubr.f32.mxu0 0.0
    %230 = vmatmul.mubr.f32.gmra.mrb[0].mxu0 %v138
    %v231 = vpop.f32.mrb[0].mxu0
    %v232 = vadd.f32 %v125, %v231
    %v233 = vpop.f32.mrb[0].mxu0
    %234 = vmatprep.mubr.f32.mxu0 0.0
    %235 = vmatmul.mubr.f32.gmra.mrb[0].mxu0 %v141
    %v236 = vpop.f32.mrb[0].mxu0
    %v237 = vadd.f32 %v126, %v236
    %v238 = vpop.f32.mrb[0].mxu0
    %239 = vmatprep.mubr.f32.mxu0 0.0
    %240 = vmatmul.mubr.f32.gmra.mrb[0].mxu0 %v144
    %v241 = vpop.f32.mrb[0].mxu0
    %v242 = vadd.f32 %v127, %v241
    %v243 = vpop.f32.mrb[0].mxu0
    %244 = vmatprep.mubr.f32.mxu0 0.0
    %245 = vmatmul.mubr.f32.gmra.mrb[0].mxu0 %v147
    %v246 = vpop.f32.mrb[0].mxu0
    %v247 = vadd.f32 %v128, %v246
    %v248 = vpop.f32.mrb[0].mxu0
    %249 = vmatprep.mubr.f32.mxu0 0.0
    %250 = vmatmul.mubr.f32.gmra.mrb[0].mxu0 %v150
    %v251 = vpop.f32.mrb[0].mxu0
    %v252 = vadd.f32 %v129, %v251
    %v253 = vpop.f32.mrb[0].mxu0
    %254 = vmatprep.mubr.f32.mxu0 0.0
    %255 = vmatmul.mubr.f32.gmra.mrb[0].mxu0 %v153
    %v256 = vpop.f32.mrb[0].mxu0
    %v257 = vadd.f32 %v130, %v256
    %v258 = vpop.f32.mrb[0].mxu0
    %259 = vdwg.mxu0
    %v260 = vld [vmem:[%s4] sm:$0x1]
    %v261 = vstv %s35
    %v262 = vmul.f32 %v260, %v261
    %v264 = vlaneseq
    %v265 = vshrl.u32 %v264, 7
    %v266 = vsub.s32 0, %v265
    %v267 = vrot.slane %v262, %v266
    %v269 = vmul.f32 %v222, %v267
    %v270 = vmul.f32 %v227, %v267
    %v271 = vmul.f32 %v232, %v267
    %v272 = vmul.f32 %v237, %v267
    %v273 = vmul.f32 %v242, %v267
    %v274 = vmul.f32 %v247, %v267
    %v275 = vmul.f32 %v252, %v267
    %v276 = vmul.f32 %v257, %v267
    %v277 = vmul.f32 %v269, %v269
    %v278 = vmul.f32 %v270, %v270
    %v279 = vmul.f32 %v271, %v271
    %v280 = vmul.f32 %v272, %v272
    %v281 = vmul.f32 %v273, %v273
    %v282 = vmul.f32 %v274, %v274
    %v283 = vmul.f32 %v275, %v275
    %v284 = vmul.f32 %v276, %v276
    %285 = vadd.xlane.f32.xlu0 %v277
    %v286 = vpop.xlane.xlu0 %285
    %287 = vadd.xlane.f32.xlu0 %v278
    %v288 = vpop.xlane.xlu0 %287
    %289 = vadd.xlane.f32.xlu0 %v279
    %v290 = vpop.xlane.xlu0 %289
    %291 = vadd.xlane.f32.xlu0 %v280
    %v292 = vpop.xlane.xlu0 %291
    %293 = vadd.xlane.f32.xlu0 %v281
    %v294 = vpop.xlane.xlu0 %293
    %295 = vadd.xlane.f32.xlu0 %v282
    %v296 = vpop.xlane.xlu0 %295
    %297 = vadd.xlane.f32.xlu0 %v283
    %v298 = vpop.xlane.xlu0 %297
    %299 = vadd.xlane.f32.xlu0 %v284
    %v300 = vpop.xlane.xlu0 %299
    %v301 = vrsqrt.pop %v286
    %v302 = vmul.f32 %v286, %v301
    %vm303 = vcmp.eq.f32.partialorder %v286, inf
    %v304 = vsel %vm303, %v286, %v302
    %vm305 = vcmp.eq.f32.partialorder %v286, 0.0
    %v306 = vand.u32 %v286, 2147483648
    %v307 = vsel %vm305, %v306, %v304
    %v308 = vrsqrt.pop %v288
    %v309 = vmul.f32 %v288, %v308
    %vm310 = vcmp.eq.f32.partialorder %v288, inf
    %v311 = vsel %vm310, %v288, %v309
    %vm312 = vcmp.eq.f32.partialorder %v288, 0.0
    %v313 = vand.u32 %v288, 2147483648
    %v314 = vsel %vm312, %v313, %v311
    %v315 = vrsqrt.pop %v290
    %v316 = vmul.f32 %v290, %v315
    %vm317 = vcmp.eq.f32.partialorder %v290, inf
    %v318 = vsel %vm317, %v290, %v316
    %vm319 = vcmp.eq.f32.partialorder %v290, 0.0
    %v320 = vand.u32 %v290, 2147483648
    %v321 = vsel %vm319, %v320, %v318
    %v322 = vrsqrt.pop %v292
    %v323 = vmul.f32 %v292, %v322
    %vm324 = vcmp.eq.f32.partialorder %v292, inf
    %v325 = vsel %vm324, %v292, %v323
    %vm326 = vcmp.eq.f32.partialorder %v292, 0.0
    %v327 = vand.u32 %v292, 2147483648
    %v328 = vsel %vm326, %v327, %v325
    %v329 = vrsqrt.pop %v294
    %v330 = vmul.f32 %v294, %v329
    %vm331 = vcmp.eq.f32.partialorder %v294, inf
    %v332 = vsel %vm331, %v294, %v330
    %vm333 = vcmp.eq.f32.partialorder %v294, 0.0
    %v334 = vand.u32 %v294, 2147483648
    %v335 = vsel %vm333, %v334, %v332
    %v336 = vrsqrt.pop %v296
    %v337 = vmul.f32 %v296, %v336
    %vm338 = vcmp.eq.f32.partialorder %v296, inf
    %v339 = vsel %vm338, %v296, %v337
    %vm340 = vcmp.eq.f32.partialorder %v296, 0.0
    %v341 = vand.u32 %v296, 2147483648
    %v342 = vsel %vm340, %v341, %v339
    %v343 = vrsqrt.pop %v298
    %v344 = vmul.f32 %v298, %v343
    %vm345 = vcmp.eq.f32.partialorder %v298, inf
    %v346 = vsel %vm345, %v298, %v344
    %vm347 = vcmp.eq.f32.partialorder %v298, 0.0
    %v348 = vand.u32 %v298, 2147483648
    %v349 = vsel %vm347, %v348, %v346
    %v350 = vrsqrt.pop %v300
    %v351 = vmul.f32 %v300, %v350
    %vm352 = vcmp.eq.f32.partialorder %v300, inf
    %v353 = vsel %vm352, %v300, %v351
    %vm354 = vcmp.eq.f32.partialorder %v300, 0.0
    %v355 = vand.u32 %v300, 2147483648
    %v356 = vsel %vm354, %v355, %v353
    %v357 = vmax.f32 %v307, 1e-12
    %v358 = vmax.f32 %v314, 1e-12
    %v359 = vmax.f32 %v321, 1e-12
    %v360 = vmax.f32 %v328, 1e-12
    %v361 = vmax.f32 %v335, 1e-12
    %v362 = vmax.f32 %v342, 1e-12
    %v363 = vmax.f32 %v349, 1e-12
    %v364 = vmax.f32 %v356, 1e-12
    %v365 = vrcp.pop %v357
    %v366 = vmul.f32 %v269, %v365
    %v367 = vrcp.pop %v358
    %v368 = vmul.f32 %v270, %v367
    %v369 = vrcp.pop %v359
    %v370 = vmul.f32 %v271, %v369
    %v371 = vrcp.pop %v360
    %v372 = vmul.f32 %v272, %v371
    %v373 = vrcp.pop %v361
    %v374 = vmul.f32 %v273, %v373
    %v375 = vrcp.pop %v362
    %v376 = vmul.f32 %v274, %v375
    %v377 = vrcp.pop %v363
    %v378 = vmul.f32 %v275, %v377
    %v379 = vrcp.pop %v364
    %v380 = vmul.f32 %v276, %v379
    %381 = vst [vmem:[#allocation5] sm:$0xff] %v366
    %382 = vst [vmem:[#allocation5 + $0x8] sm:$0xff] %v368
    %383 = vst [vmem:[#allocation5 + $0x10] sm:$0xff] %v370
    %384 = vst [vmem:[#allocation5 + $0x18] sm:$0xff] %v372
    %385 = vst [vmem:[#allocation5 + $0x20] sm:$0xff] %v374
    %386 = vst [vmem:[#allocation5 + $0x28] sm:$0xff] %v376
    %387 = vst [vmem:[#allocation5 + $0x30] sm:$0xff] %v378
    %388 = vst [vmem:[#allocation5 + $0x38] sm:$0xff] %v380
    // Predicated region
    $region26: #{tpu_custom_call.1} parent=1 // pred_check
      _
    $region27: #{tpu_custom_call.1} parent=1 // pred_check_branch
      %390 = sbr.rel (0) target = $region29
    $region28: #{tpu_custom_call.1} parent=1 // pred_region
      %s392 = ssub.s32 1024, 1024
      %393 = vsyncadd [#allocation3], %s392
      %s394 = sshll.u32 [#allocation5], 4
      %s395 = int_to_ptr.vmem [resolvable:$true] %s394
      %400 = dma.vmem_to_hbm [thread:$0]  %s395, 1024, %s5, [#allocation3], 128, 128, 8
    $region29: #{tpu_custom_call.1} parent=1 // pred_fallthru
      _
    // Predicated region
    $region30: #{tpu_custom_call.1} parent=1 // pred_check
      _
    $region31: #{tpu_custom_call.1} parent=1 // pred_check_branch
      %402 = sbr.rel (0) target = $region33
    $region32: #{tpu_custom_call.1} parent=1 // pred_region
      %403 = dma.done [#allocation3], 1024
    $region33: #{tpu_custom_call.1} parent=1 // pred_fallthru
      _
    %404 = vsyncpa [#allocation3], 1
    %405 = vsyncpa [#allocation4], 1

</llo_original>
